<compile_context>
chip_gen: v6e
topology: v6e:2x2x1
jax: 0.10.0
libtpu: 0.0.40
codegen_flags: <defaults>
</compile_context>

<pallas_src>
import functools

import jax
import jax.numpy as jnp
from jax.experimental import pallas as pl
from jax.experimental.pallas import tpu as pltpu

NUM_CLASSES = 10
_DEFAULT_BLOCK_COLS = 32768   # lane-dense batch columns per grid step


def _taylor_loss_kernel(coef_ref, logits_ref, labels_ref, out_ref, acc_ref, *,
                        total_cols, block_cols, blocks_per_core, num_blocks,
                        num_classes, approx_recip):
    # coef_ref   : SMEM f32[8]        Taylor coefficients x[0..7]
    # logits_ref : VMEM [C, blk]      class-major logits tile (batch on lanes)
    # labels_ref : VMEM i32[1, blk]   labels tile (batch on lanes)
    # out_ref    : SMEM f32[1, 1]     per-core partial loss (written on last step)
    # acc_ref    : VMEM f32[1, blk]   per-lane partial-sum accumulator (class-reduced)
    core = pl.program_id(0)           # "parallel" axis (TensorCores on v7x)
    k = pl.program_id(1)              # "arbitrary" batch-block reduction axis

    @pl.when(k == 0)
    def _():
        acc_ref[...] = jnp.zeros_like(acc_ref)

    logits = logits_ref[...].astype(jnp.float32)             # [C, blk]
    C, blk = logits.shape

    # Scalar path: read + pre-fold constant factors (cheap scalar ops).
    c0 = coef_ref[0]
    c1 = coef_ref[1]
    c2 = coef_ref[2]
    a3 = coef_ref[3] * 0.5
    a4 = coef_ref[4] * (1.0 / 6.0)
    c5 = coef_ref[5]
    a6 = coef_ref[6] * 0.5
    a7 = coef_ref[7] * 0.5

    # Numerically stable softmax over the class (sublane) axis.
    m = jnp.max(logits, axis=0, keepdims=True)                # [1, blk]
    e = jnp.exp(logits - m)
    denom = jnp.sum(e, axis=0, keepdims=True)                 # [1, blk]
    p = e * pl.reciprocal(denom, approx=approx_recip)

    # one_hot(target) - x[1], fused into a single select.
    cls = jax.lax.broadcasted_iota(jnp.int32, (C, blk), 0)
    t = jnp.where(cls == labels_ref[...], 1.0 - c1, -c1)      # [C, blk]
    o = p - c0

    # Horner-folded polynomial (~7 vector multiplies).
    ot = o * t
    term = t * (c2 + t * (a3 + t * a4)) + ot * (c5 + t * a6 + o * a7)

    def accumulate(vals):
        # Reduce over the class axis on the XLU before the RMW: acc is [1, blk],
        # so the accumulator load/store traffic is ~16x smaller than a full tile.
        acc_ref[...] += jnp.sum(vals, axis=0, keepdims=True)

    if total_cols % block_cols != 0:
        # The padded tail exists only in the globally-last block; every other
        # step accumulates mask-free (iota+compare+select confined to one step).
        gblk = core * blocks_per_core + k
        is_tail = gblk == num_blocks - 1

        @pl.when(jnp.logical_not(is_tail))
        def _():
            accumulate(term)

        @pl.when(is_tail)
        def _():
            col = jax.lax.broadcasted_iota(jnp.int32, (C, blk), 1)
            valid = (gblk * block_cols + col) < total_cols
            # Keep the select (not a multiplicative mask): out-of-bounds columns
            # may have flowed inf/NaN through exp/softmax.
            accumulate(jnp.where(valid, term, 0.0))
    else:
        accumulate(term)

    @pl.when(k == pl.num_programs(1) - 1)
    def _():
        out_ref[0, 0] = jnp.sum(acc_ref[...]) * (-1.0 / num_classes)


def taylor_loss_cb(logits_cb, target, x, *, block_cols=None, num_cores=1,
                   approx_recip=False):
    """TaylorLoss from class-major logits.

    logits_cb : [C, B] logits (any float dtype; batch on the lane axis — emit this
                layout from the producer to avoid an extra HBM transpose pass).
    target    : [B] integer labels.
    x         : [8] Taylor coefficients.
    num_cores : set 2 on v7x to shard the batch across both TensorCores
                (correct but no-gain on v5e/v6e).
    approx_recip : route the softmax reciprocal to the EUP (vrcp); enable only
                   after validating your tolerance (~1e-3-level relative error).
    Returns the scalar loss (f32).
    """
    C, B = logits_cb.shape
    assert C == NUM_CLASSES

    if block_cols is None:
        block_cols = _DEFAULT_BLOCK_COLS
    block_cols = min(block_cols, B)
    if block_cols != B and block_cols % 128 != 0:
        raise ValueError("block_cols must equal B or be a multiple of 128")
    num_blocks = pl.cdiv(B, block_cols)

    num_cores = max(int(num_cores), 1)
    if num_blocks % num_cores != 0:
        num_cores = 1          # fall back: keep every core's block range in bounds
    blocks_per_core = num_blocks // num_cores

    labels = target.astype(jnp.int32).reshape(1, B)           # [1, B] lane-dense
    coefs = jnp.asarray(x, jnp.float32).reshape(8)            # [8] -> SMEM

    # VMEM budget: double-buffered logits + labels tiles plus the [1, blk] accumulator,
    # with headroom; admitted explicitly so large blocks work on every generation.
    c_pad = 16                                                # 10 classes pad to 16 sublanes
    itemsize = jnp.dtype(logits_cb.dtype).itemsize
    est = (2 * (c_pad * block_cols * itemsize + 8 * block_cols * 4)
           + 8 * block_cols * 4 + (2 << 20))
    vmem_limit = int(min(64 << 20, max(32 << 20, 2 * est)))

    kernel = functools.partial(
        _taylor_loss_kernel,
        total_cols=B, block_cols=block_cols, blocks_per_core=blocks_per_core,
        num_blocks=num_blocks, num_classes=C, approx_recip=approx_recip)

    partials = pl.pallas_call(
        kernel,
        out_shape=jax.ShapeDtypeStruct((num_cores, 1), jnp.float32),
        grid_spec=pltpu.PrefetchScalarGridSpec(
            num_scalar_prefetch=0,
            grid=(num_cores, blocks_per_core),
            in_specs=[
                pl.BlockSpec(memory_space=pltpu.MemorySpace.SMEM),          # x[0..7]
                pl.BlockSpec((C, block_cols),
                             lambda c, k: (0, c * blocks_per_core + k)),    # logits tile
                pl.BlockSpec((1, block_cols),
                             lambda c, k: (0, c * blocks_per_core + k)),    # labels tile
            ],
            out_specs=pl.BlockSpec((1, 1), lambda c, k: (c, 0),
                                   memory_space=pltpu.MemorySpace.SMEM),
            scratch_shapes=[pltpu.VMEM((1, block_cols), jnp.float32)],
        ),
        compiler_params=pltpu.CompilerParams(
            dimension_semantics=("parallel", "arbitrary"),
            vmem_limit_bytes=vmem_limit,
        ),
    )(coefs, logits_cb, labels)

    return jnp.sum(partials)                                   # sum per-core partials


def taylor_loss(output, target, x, **kwargs):
    """Compat shim matching the PyTorch signature: output is [B, C] logits.
    NOTE: this does an XLA transpose (one extra HBM read+write pass over the
    logits). Prefer emitting [C, B] from the producer and calling taylor_loss_cb."""
    return taylor_loss_cb(jnp.transpose(output, (1, 0)), target, x, **kwargs)


if __name__ == "__main__":
    key = jax.random.PRNGKey(0)
    k1, k2, k3 = jax.random.split(key, 3)

    def ref_loss(logits_bc, tgt, coef):
        p = jax.nn.softmax(logits_bc.astype(jnp.float32), axis=1)
        oh = jax.nn.one_hot(tgt, NUM_CLASSES, dtype=jnp.float32)
        t = oh - coef[1]
        o = p - coef[0]
        return jnp.sum(t * coef[2] + t ** 2 * (coef[3] * 0.5) + t ** 3 * (coef[4] / 6.0)
                       + o * t * coef[5] + o * t ** 2 * (coef[6] * 0.5)
                       + o ** 2 * t * (coef[7] * 0.5)) * (-1.0 / NUM_CLASSES)

    # Small demo shapes; block_cols=128 so the multi-block + masked-tail paths are hit.
    B = 300
    logits_cb = jax.random.normal(k1, (NUM_CLASSES, B), dtype=jnp.float32)   # [C, B]
    target = jax.random.randint(k2, (B,), 0, NUM_CLASSES, dtype=jnp.int32)
    x = 0.1 * jax.random.normal(k3, (8,), dtype=jnp.float32)

    # 1) single-core grid, 3 blocks with a masked tail.
    loss = taylor_loss_cb(logits_cb, target, x, block_cols=128)
    jax.block_until_ready(loss)
    ref = ref_loss(logits_cb.T, target, x)
    assert jnp.allclose(loss, ref, atol=2e-4, rtol=2e-4), (loss, ref)

    # 2) two-core ("parallel") grid split — ~2x on v7x, correct anywhere.
    B2 = 512
    k4, k5 = jax.random.split(k3)
    logits2 = jax.random.normal(k4, (NUM_CLASSES, B2), dtype=jnp.float32)
    target2 = jax.random.randint(k5, (B2,), 0, NUM_CLASSES, dtype=jnp.int32)
    loss2 = taylor_loss_cb(logits2, target2, x, block_cols=128, num_cores=2)
    jax.block_until_ready(loss2)
    ref2 = ref_loss(logits2.T, target2, x)
    assert jnp.allclose(loss2, ref2, atol=2e-4, rtol=2e-4), (loss2, ref2)

    # 3) bf16 logits streamed natively (halves HBM traffic; most useful on v5e).
    logits_bf16 = logits_cb.astype(jnp.bfloat16)
    loss3 = taylor_loss_cb(logits_bf16, target, x, block_cols=128)
    jax.block_until_ready(loss3)
    ref3 = ref_loss(logits_bf16.astype(jnp.float32).T, target, x)
    assert jnp.allclose(loss3, ref3, atol=1e-3, rtol=1e-3), (loss3, ref3)

    # 4) approx-reciprocal (EUP) path: exercised for compile/execute + finiteness;
    #    enable in production only after validating against your own tolerance.
    loss4 = taylor_loss_cb(logits_cb, target, x, block_cols=128, approx_recip=True)
    jax.block_until_ready(loss4)
    assert bool(jnp.isfinite(loss4)), loss4

    # 5) [B, C] compat shim (wrapper transpose; prefer producer-side [C, B]).
    loss5 = taylor_loss(logits_cb.T, target, x, block_cols=128)
    jax.block_until_ready(loss5)
    assert jnp.allclose(loss5, ref, atol=2e-4, rtol=2e-4), (loss5, ref)

    print("KERNEL_OK")
</pallas_src>

<mosaic_0001>
module attributes {stable_mosaic.version = 11 : i64} {
  func.func @_taylor_loss_kernel(%arg0: i32, %arg1: i32, %arg2: memref<8xf32, #tpu.memory_space<smem>>, %arg3: memref<10x128xf32, #tpu.memory_space<vmem>>, %arg4: memref<1x128xi32, #tpu.memory_space<vmem>>, %arg5: memref<1x1xf32, #tpu.memory_space<smem>>, %arg6: memref<1x128xf32, #tpu.memory_space<vmem>>) attributes {dimension_semantics = [#tpu.dimension_semantics<parallel>, #tpu.dimension_semantics<arbitrary>], iteration_bounds = array<i64: 1, 3>, scalar_prefetch = 0 : i64, scratch_operands = 1 : i64, tpu.core_type = #tpu.core_type<tc>, window_params = [{transform_indices = @transform_0, window_bounds = array<i64: 8>}, {transform_indices = @transform_1, window_bounds = array<i64: 10, 128>}, {transform_indices = @transform_2, window_bounds = array<i64: 1, 128>}, {transform_indices = @transform_3, window_bounds = array<i64: 1, 1>}]} {
    %c0_i32 = arith.constant 0 : i32
    %0 = arith.cmpi eq, %arg1, %c0_i32 : i32
    %1 = arith.extui %0 : i1 to i32
    %c0_i32_0 = arith.constant 0 : i32
    %2 = arith.cmpi ne, %1, %c0_i32_0 : i32
    scf.if %2 {
      %cst_16 = arith.constant 0.000000e+00 : f32
      %66 = vector.broadcast %cst_16 : f32 to vector<1x128xf32>
      %c0_17 = arith.constant 0 : index
      %c0_18 = arith.constant 0 : index
      %67 = vector.load %arg6[%c0_17, %c0_18] : memref<1x128xf32, #tpu.memory_space<vmem>>, vector<1x128xf32>
      tpu.vector_store %arg6[%c0_17, %c0_18], %66 {strides = array<i32>} : memref<1x128xf32, #tpu.memory_space<vmem>>, vector<1x128xf32>,
    } else {
    }
    %c0 = arith.constant 0 : index
    %c0_1 = arith.constant 0 : index
    %3 = vector.load %arg3[%c0, %c0_1] : memref<10x128xf32, #tpu.memory_space<vmem>>, vector<10x128xf32>
    %c0_2 = arith.constant 0 : index
    %4 = memref.load %arg2[%c0_2] : memref<8xf32, #tpu.memory_space<smem>>
    %c1 = arith.constant 1 : index
    %5 = memref.load %arg2[%c1] : memref<8xf32, #tpu.memory_space<smem>>
    %c2 = arith.constant 2 : index
    %6 = memref.load %arg2[%c2] : memref<8xf32, #tpu.memory_space<smem>>
    %c3 = arith.constant 3 : index
    %7 = memref.load %arg2[%c3] : memref<8xf32, #tpu.memory_space<smem>>
    %cst = arith.constant 5.000000e-01 : f32
    %8 = arith.mulf %7, %cst : f32
    %c4 = arith.constant 4 : index
    %9 = memref.load %arg2[%c4] : memref<8xf32, #tpu.memory_space<smem>>
    %cst_3 = arith.constant 0.166666672 : f32
    %10 = arith.mulf %9, %cst_3 : f32
    %c5 = arith.constant 5 : index
    %11 = memref.load %arg2[%c5] : memref<8xf32, #tpu.memory_space<smem>>
    %c6 = arith.constant 6 : index
    %12 = memref.load %arg2[%c6] : memref<8xf32, #tpu.memory_space<smem>>
    %cst_4 = arith.constant 5.000000e-01 : f32
    %13 = arith.mulf %12, %cst_4 : f32
    %c7 = arith.constant 7 : index
    %14 = memref.load %arg2[%c7] : memref<8xf32, #tpu.memory_space<smem>>
    %cst_5 = arith.constant 5.000000e-01 : f32
    %15 = arith.mulf %14, %cst_5 : f32
    %cst_6 = arith.constant dense<0xFF800000> : vector<128xf32>
    %16 = vector.multi_reduction <maximumf>, %3, %cst_6 [0] : vector<10x128xf32> to vector<128xf32>
    %17 = vector.shape_cast %16 : vector<128xf32> to vector<1x128xf32>
    %18 = vector.broadcast %17 : vector<1x128xf32> to vector<10x128xf32>
    %19 = arith.subf %3, %18 : vector<10x128xf32>
    %20 = math.exp %19 : vector<10x128xf32>
    %cst_7 = arith.constant dense<0.000000e+00> : vector<128xf32>
    %21 = vector.multi_reduction <add>, %20, %cst_7 [0] : vector<10x128xf32> to vector<128xf32>
    %22 = vector.shape_cast %21 : vector<128xf32> to vector<1x128xf32>
    %23 = tpu.reciprocal %22 : vector<1x128xf32> -> vector<1x128xf32>
    %24 = vector.broadcast %23 : vector<1x128xf32> to vector<10x128xf32>
    %25 = arith.mulf %20, %24 : vector<10x128xf32>
    %26 = tpu.iota {dimensions = array<i32: 0>} : vector<10x128xi32>
    %c0_8 = arith.constant 0 : index
    %c0_9 = arith.constant 0 : index
    %27 = vector.load %arg4[%c0_8, %c0_9] : memref<1x128xi32, #tpu.memory_space<vmem>>, vector<1x128xi32>
    %28 = vector.broadcast %27 : vector<1x128xi32> to vector<10x128xi32>
    %29 = arith.cmpi eq, %26, %28 : vector<10x128xi32>
    %cst_10 = arith.constant 1.000000e+00 : f32
    %30 = arith.subf %cst_10, %5 : f32
    %cst_11 = arith.constant 0.000000e+00 : f32
    %31 = arith.subf %cst_11, %5 : f32
    %32 = vector.broadcast %30 : f32 to vector<10x128xf32>
    %33 = vector.broadcast %31 : f32 to vector<10x128xf32>
    %34 = arith.select %29, %32, %33 : vector<10x128xi1>, vector<10x128xf32>
    %35 = vector.broadcast %4 : f32 to vector<10x128xf32>
    %36 = arith.subf %25, %35 : vector<10x128xf32>
    %37 = arith.mulf %36, %34 : vector<10x128xf32>
    %38 = vector.broadcast %10 : f32 to vector<10x128xf32>
    %39 = arith.mulf %34, %38 : vector<10x128xf32>
    %40 = vector.broadcast %8 : f32 to vector<10x128xf32>
    %41 = arith.addf %40, %39 : vector<10x128xf32>
    %42 = arith.mulf %34, %41 : vector<10x128xf32>
    %43 = vector.broadcast %6 : f32 to vector<10x128xf32>
    %44 = arith.addf %43, %42 : vector<10x128xf32>
    %45 = arith.mulf %34, %44 : vector<10x128xf32>
    %46 = vector.broadcast %13 : f32 to vector<10x128xf32>
    %47 = arith.mulf %34, %46 : vector<10x128xf32>
    %48 = vector.broadcast %11 : f32 to vector<10x128xf32>
    %49 = arith.addf %48, %47 : vector<10x128xf32>
    %50 = vector.broadcast %15 : f32 to vector<10x128xf32>
    %51 = arith.mulf %36, %50 : vector<10x128xf32>
    %52 = arith.addf %49, %51 : vector<10x128xf32>
    %53 = arith.mulf %37, %52 : vector<10x128xf32>
    %54 = arith.addf %45, %53 : vector<10x128xf32>
    %c3_i32 = arith.constant 3 : i32
    %55 = arith.muli %arg0, %c3_i32 : i32
    %56 = arith.addi %55, %arg1 : i32
    %c2_i32 = arith.constant 2 : i32
    %57 = arith.cmpi eq, %56, %c2_i32 : i32
    %true = arith.constant true
    %58 = arith.xori %57, %true : i1
    %59 = arith.extui %58 : i1 to i32
    %c0_i32_12 = arith.constant 0 : i32
    %60 = arith.cmpi ne, %59, %c0_i32_12 : i32
    scf.if %60 {
      %c0_16 = arith.constant 0 : index
      %c0_17 = arith.constant 0 : index
      %66 = vector.load %arg6[%c0_16, %c0_17] : memref<1x128xf32, #tpu.memory_space<vmem>>, vector<1x128xf32>
      %cst_18 = arith.constant dense<0.000000e+00> : vector<128xf32>
      %67 = vector.multi_reduction <add>, %54, %cst_18 [0] : vector<10x128xf32> to vector<128xf32>
      %68 = vector.shape_cast %67 : vector<128xf32> to vector<1x128xf32>
      %69 = arith.addf %66, %68 : vector<1x128xf32>
      %c0_19 = arith.constant 0 : index
      %c0_20 = arith.constant 0 : index
      %70 = vector.load %arg6[%c0_19, %c0_20] : memref<1x128xf32, #tpu.memory_space<vmem>>, vector<1x128xf32>
      tpu.vector_store %arg6[%c0_19, %c0_20], %69 {strides = array<i32>} : memref<1x128xf32, #tpu.memory_space<vmem>>, vector<1x128xf32>,
    } else {
    }
    %61 = arith.extui %57 : i1 to i32
    %c0_i32_13 = arith.constant 0 : i32
    %62 = arith.cmpi ne, %61, %c0_i32_13 : i32
    scf.if %62 {
      %66 = tpu.iota {dimensions = array<i32: 1>} : vector<10x128xi32>
      %c128_i32 = arith.constant 128 : i32
      %67 = arith.muli %56, %c128_i32 : i32
      %68 = vector.broadcast %67 : i32 to vector<10x128xi32>
      %69 = arith.addi %68, %66 : vector<10x128xi32>
      %c300_i32 = arith.constant 300 : i32
      %70 = vector.broadcast %c300_i32 : i32 to vector<10x128xi32>
      %71 = arith.cmpi slt, %69, %70 : vector<10x128xi32>
      %cst_16 = arith.constant 0.000000e+00 : f32
      %72 = vector.broadcast %cst_16 : f32 to vector<10x128xf32>
      %73 = arith.select %71, %54, %72 : vector<10x128xi1>, vector<10x128xf32>
      %c0_17 = arith.constant 0 : index
      %c0_18 = arith.constant 0 : index
      %74 = vector.load %arg6[%c0_17, %c0_18] : memref<1x128xf32, #tpu.memory_space<vmem>>, vector<1x128xf32>
      %cst_19 = arith.constant dense<0.000000e+00> : vector<128xf32>
      %75 = vector.multi_reduction <add>, %73, %cst_19 [0] : vector<10x128xf32> to vector<128xf32>
      %76 = vector.shape_cast %75 : vector<128xf32> to vector<1x128xf32>
      %77 = arith.addf %74, %76 : vector<1x128xf32>
      %c0_20 = arith.constant 0 : index
      %c0_21 = arith.constant 0 : index
      %78 = vector.load %arg6[%c0_20, %c0_21] : memref<1x128xf32, #tpu.memory_space<vmem>>, vector<1x128xf32>
      tpu.vector_store %arg6[%c0_20, %c0_21], %77 {strides = array<i32>} : memref<1x128xf32, #tpu.memory_space<vmem>>, vector<1x128xf32>,
    } else {
    }
    %c2_i32_14 = arith.constant 2 : i32
    %63 = arith.cmpi eq, %arg1, %c2_i32_14 : i32
    %64 = arith.extui %63 : i1 to i32
    %c0_i32_15 = arith.constant 0 : i32
    %65 = arith.cmpi ne, %64, %c0_i32_15 : i32
    scf.if %65 {
      %c0_16 = arith.constant 0 : index
      %c0_17 = arith.constant 0 : index
      %66 = vector.load %arg6[%c0_16, %c0_17] : memref<1x128xf32, #tpu.memory_space<vmem>>, vector<1x128xf32>
      %67 = vector.shape_cast %66 : vector<1x128xf32> to vector<1x1x128xf32>
      %cst_18 = arith.constant dense<0.000000e+00> : vector<1xf32>
      %68 = vector.multi_reduction <add>, %67, %cst_18 [1, 2] : vector<1x1x128xf32> to vector<1xf32>
      %69 = vector.shape_cast %68 : vector<1xf32> to vector<1x1x1xf32>
      %70 = vector.extract %69[0, 0, 0] : f32 from vector<1x1x1xf32>
      %cst_19 = arith.constant -1.000000e-01 : f32
      %71 = arith.mulf %70, %cst_19 : f32
      %c0_20 = arith.constant 0 : index
      %c0_21 = arith.constant 0 : index
      %72 = memref.load %arg5[%c0_20, %c0_21] : memref<1x1xf32, #tpu.memory_space<smem>>
      memref.store %71, %arg5[%c0_20, %c0_21] : memref<1x1xf32, #tpu.memory_space<smem>>
    } else {
    }
    return
  }
  func.func @transform_0(%arg0: i32, %arg1: i32) -> i32 {
    %c0_i32 = arith.constant 0 : i32
    %c0_i32_0 = arith.constant 0 : i32
    return %c0_i32 : i32
  }
  func.func @transform_1(%arg0: i32, %arg1: i32) -> (i32, i32) {
    %c3_i32 = arith.constant 3 : i32
    %0 = arith.muli %arg0, %c3_i32 : i32
    %1 = arith.addi %0, %arg1 : i32
    %c0_i32 = arith.constant 0 : i32
    %c0_i32_0 = arith.constant 0 : i32
    return %c0_i32, %1 : i32, i32
  }
  func.func @transform_2(%arg0: i32, %arg1: i32) -> (i32, i32) {
    %c3_i32 = arith.constant 3 : i32
    %0 = arith.muli %arg0, %c3_i32 : i32
    %1 = arith.addi %0, %arg1 : i32
    %c0_i32 = arith.constant 0 : i32
    %c0_i32_0 = arith.constant 0 : i32
    return %c0_i32, %1 : i32, i32
  }
  func.func @transform_3(%arg0: i32, %arg1: i32) -> (i32, i32) {
    %c0_i32 = arith.constant 0 : i32
    %c0_i32_0 = arith.constant 0 : i32
    return %arg0, %c0_i32 : i32, i32
  }
}

</mosaic_0001>

<llo_original>
// kernel: tpu_custom_call.1
$region0: #{tpu_custom_call.1}
  #allocation0 [shape = 'u32[]', space=smem, size = 0x4, offset = 0x4, fixed_abs, tag = 'smem constant byte address 0x4 - core index']
  #allocation1 [shape = 'u32[144,128]{1,0:T(1,128)}', space=vmem, size = 0x12000, scoped, tag = 'internal scratch']
  #allocation2 [shape = 'f32[1,128]{1,0:T(1,128)}', space=vmem, size = 0x200, scoped, tag = 'scratch operand']
  %s0 = inlined_call_operand.hbm [shape: f32[8], index: 0, kind: input, shape index: {}]
  %s1 = inlined_call_operand.hbm [shape: f32[10,300], index: 1, kind: input, shape index: {}]
  %s2 = inlined_call_operand.vmem [shape: s32[1,300], index: 2, kind: input, shape index: {}]
  %s3 = inlined_call_operand.hbm [shape: f32[1,1], index: 3, kind: output, shape index: {}]
  %s4 = sld [smem:[#allocation0]]
  $region69: #{tpu_custom_call.1} parent=0
    _
  %s6 = ssub.s32 1, %s4
  %s7 = scalar_select 0, %s6, %s4
  $region1: #{tpu_custom_call.1} parent=0
    #allocation3 [shape = 'u8[512]{0}', space=smem, size = 0x200, scoped, tag = 'input window, operand 0, single buffered']
    #allocation4 [shape = 's32[2]{0}', space=sflag, size = 0x8, scoped, tag = 'scoped memory for tpu_custom_call.1']
    #allocation5 [shape = 's32[2]{0}', space=sflag, size = 0x8, scoped, tag = 'scoped memory for tpu_custom_call.1']
    #allocation6 [shape = 's32[2]{0}', space=sflag, size = 0x8, scoped, tag = 'scoped memory for tpu_custom_call.1']
    #allocation7 [shape = 'u8[16384]{0}', space=vmem, size = 0x4000, scoped, tag = 'input window, operand 1']
    #allocation8 [shape = 'u8[512]{0}', space=smem, size = 0x200, scoped, tag = 'output window, operand 0, single buffered']
    %8 = vsyncpa [#allocation5], 0
    %9 = vsyncpa [#allocation4], 0
    %s10 = scalar_lea.sflag [#allocation4], 1
    %11 = vsyncpa %s10, 0
    %12 = vsyncpa [#allocation6], 0
    loop: start=0, step=1, limit=5
    $region2: #{tpu_custom_call.1} parent=1 // loop_pre_header
      _
    $region3: #{tpu_custom_call.1} parent=1 // loop_header
      %s14 = sphi 0, %s18
      %p15 = scmp.ge.s32.totalorder %s14, 5
      %s21 = sphi 0, %s33
      %s22 = sphi 0, %s29
      %s23 = sphi 0, %s21
      %s24 = sphi 0, %s22
      %s25 = sphi 0, %s23
      %s26 = sphi 0, %s24
      %s34 = sphi 0, %s34
      %s36 = sphi 0, %s34
      %s37 = sphi 0, %s36
      %s51 = sphi 0, %s37
      %s61 = sphi 0, %s63
      %s64 = sphi 0, %s61
      %s65 = sphi 0, %s64
      %s81 = sphi 0, %s65
      %s91 = sphi 0, %s93
      %s94 = sphi 0, %s91
      %s95 = sphi 0, %s94
      %s111 = sphi 0, %s95
      %s117 = sphi 0, %s119
      %s120 = sphi 0, %s117
      %s121 = sphi 0, %s120
      %s137 = sphi 0, %s121
    $region4: #{tpu_custom_call.1} parent=1 // loop_header_branch
      %17 = sbr.rel (%p15) target = $region8
    $region5: #{tpu_custom_call.1} parent=1 // loop_body
      %s19 = ssub.s32 %s14, 1
      %s20 = ssub.s32 %s14, 2
      %s27 = sadd.s32 1, %s22
      %p28 = scmp.ge.s32.totalorder %s27, 3
      %s29 = scalar_select %p28, 0, %s27
      %s30 = sadd.s32 1, %s21
      %s31 = scalar_select %p28, %s30, %s21
      %p32 = scmp.ge.s32.totalorder %s31, 1
      %s33 = scalar_select %p32, 0, %s31
      %s35 = sadd.s32 %s34, 1
      %p38 = scmp.eq.s32.totalorder %s14, 2
      %p39 = scmp.ne.s32.totalorder %s34, %s36
      %p40 = scmp.eq.s32.totalorder %s14, 0
      %p41 = por %p39, %p40
      %p42 = scmp.ne.s32.totalorder %s34, %s36
      %p43 = scmp.eq.s32.totalorder %s19, 2
      %p44 = por %p42, %p43
      %p45 = scmp.ne.s32.totalorder %s36, %s37
      %p46 = scmp.eq.s32.totalorder %s19, 0
      %p47 = por %p45, %p46
      %p48 = scmp.ne.s32.totalorder %s36, %s37
      %p49 = scmp.eq.s32.totalorder %s20, 2
      %p50 = por %p48, %p49
      %p52 = scmp.ne.s32.totalorder %s37, %s51
      %p53 = scmp.eq.s32.totalorder %s20, 0
      %p54 = por %p52, %p53
      %s55 = smul.u32 %s21, 3
      %s56 = sadd.s32 %s55, %s22
      %s57 = smul.u32 %s33, 3
      %s58 = sadd.s32 %s57, %s29
      %s59 = ssub.s32 %s56, %s58
      %p60 = scmp.eq.s32.totalorder %s59, 0
      %s62 = sadd.s32 %s61, 1
      %s63 = scalar_select %p60, %s61, %s62
      %p66 = pneg %p60
      %p67 = scmp.eq.s32.totalorder %s14, 2
      %p68 = por %p66, %p67
      %p69 = scmp.ne.s32.totalorder %s61, %s64
      %p70 = scmp.eq.s32.totalorder %s14, 0
      %p71 = por %p69, %p70
      %p72 = scmp.ne.s32.totalorder %s61, %s64
      %p73 = scmp.eq.s32.totalorder %s19, 2
      %p74 = por %p72, %p73
      %p75 = scmp.ne.s32.totalorder %s64, %s65
      %p76 = scmp.eq.s32.totalorder %s19, 0
      %p77 = por %p75, %p76
      %p78 = scmp.ne.s32.totalorder %s64, %s65
      %p79 = scmp.eq.s32.totalorder %s20, 2
      %p80 = por %p78, %p79
      %p82 = scmp.ne.s32.totalorder %s65, %s81
      %p83 = scmp.eq.s32.totalorder %s20, 0
      %p84 = por %p82, %p83
      %s85 = smul.u32 %s21, 3
      %s86 = sadd.s32 %s85, %s22
      %s87 = smul.u32 %s33, 3
      %s88 = sadd.s32 %s87, %s29
      %s89 = ssub.s32 %s86, %s88
      %p90 = scmp.eq.s32.totalorder %s89, 0
      %s92 = sadd.s32 %s91, 1
      %s93 = scalar_select %p90, %s91, %s92
      %p96 = pneg %p90
      %p97 = scmp.eq.s32.totalorder %s14, 2
      %p98 = por %p96, %p97
      %p99 = scmp.ne.s32.totalorder %s91, %s94
      %p100 = scmp.eq.s32.totalorder %s14, 0
      %p101 = por %p99, %p100
      %p102 = scmp.ne.s32.totalorder %s91, %s94
      %p103 = scmp.eq.s32.totalorder %s19, 2
      %p104 = por %p102, %p103
      %p105 = scmp.ne.s32.totalorder %s94, %s95
      %p106 = scmp.eq.s32.totalorder %s19, 0
      %p107 = por %p105, %p106
      %p108 = scmp.ne.s32.totalorder %s94, %s95
      %p109 = scmp.eq.s32.totalorder %s20, 2
      %p110 = por %p108, %p109
      %p112 = scmp.ne.s32.totalorder %s95, %s111
      %p113 = scmp.eq.s32.totalorder %s20, 0
      %p114 = por %p112, %p113
      %s115 = ssub.s32 %s21, %s33
      %p116 = scmp.eq.s32.totalorder %s115, 0
      %s118 = sadd.s32 %s117, 1
      %s119 = scalar_select %p116, %s117, %s118
      %p122 = pneg %p116
      %p123 = scmp.eq.s32.totalorder %s14, 2
      %p124 = por %p122, %p123
      %p125 = scmp.ne.s32.totalorder %s117, %s120
      %p126 = scmp.eq.s32.totalorder %s14, 0
      %p127 = por %p125, %p126
      %p128 = scmp.ne.s32.totalorder %s117, %s120
      %p129 = scmp.eq.s32.totalorder %s19, 2
      %p130 = por %p128, %p129
      %p131 = scmp.ne.s32.totalorder %s120, %s121
      %p132 = scmp.eq.s32.totalorder %s19, 0
      %p133 = por %p131, %p132
      %p134 = scmp.ne.s32.totalorder %s120, %s121
      %p135 = scmp.eq.s32.totalorder %s20, 2
      %p136 = por %p134, %p135
      %p138 = scmp.ne.s32.totalorder %s121, %s137
      %p139 = scmp.eq.s32.totalorder %s20, 0
      %p140 = por %p138, %p139
      %p141 = scmp.le.s32.totalorder 1, %s14
      %p142 = scmp.lt.s32.totalorder %s14, 4
      %p143 = pnand %p141, %p142
      %p144 = pneg %p143
      // Predicated region
      $region9: #{tpu_custom_call.1} parent=5 // pred_check
        _
      $region10: #{tpu_custom_call.1} parent=5 // pred_check_branch
        %146 = sbr.rel (%p143) target = $region12
      $region11: #{tpu_custom_call.1} parent=5 // pred_region
        %s147 = ssub.s32 %s14, 1
        // Predicated region
        $region13: #{tpu_custom_call.1} parent=11 // pred_check
          %p148 = pneg %p47
        $region14: #{tpu_custom_call.1} parent=11 // pred_check_branch
          %150 = sbr.rel (%p148) target = $region16
        $region15: #{tpu_custom_call.1} parent=11 // pred_region
          %s152 = ssub.s32 16, 16
          %153 = vsyncadd [#allocation5], %s152
          %156 = dma.hbm_to_smem %s0, 16, [#allocation3], [#allocation5]
        $region16: #{tpu_custom_call.1} parent=11 // pred_fallthru
          _
      $region12: #{tpu_custom_call.1} parent=5 // pred_fallthru
        _
      %p157 = scmp.lt.s32.totalorder %s14, 3
      // Predicated region
      $region17: #{tpu_custom_call.1} parent=5 // pred_check
        %p158 = pneg %p157
      $region18: #{tpu_custom_call.1} parent=5 // pred_check_branch
        %160 = sbr.rel (%p158) target = $region20
      $region19: #{tpu_custom_call.1} parent=5 // pred_region
        // Predicated region
        $region21: #{tpu_custom_call.1} parent=19 // pred_check
          %p161 = pneg %p71
        $region22: #{tpu_custom_call.1} parent=19 // pred_check_branch
          %163 = sbr.rel (%p161) target = $region24
        $region23: #{tpu_custom_call.1} parent=19 // pred_region
          %s164 = sand.u32 %s61, 1
          %s165 = scalar_lea.sflag [#allocation4], %s164
          %s166 = sand.u32 %s61, 1
          %s167 = smul.addr %s166, 16
          %s168 = scalar_lea.vmem [#allocation7], %s167
          %s169 = smul.u32 %s21, 3
          %s170 = sadd.s32 %s169, %s22
          %s172 = ssub.s32 256, 256
          %173 = vsyncadd %s165, %s172
          %s174 = smul.addr %s170, 128
          %s175 = scalar_lea.hbm %s1, %s174
          %s176 = sshll.u32 %s168, 4
          %s177 = int_to_ptr.vmem [resolvable:$true] %s176
          %182 = dma.hbm_to_vmem [thread:$0]  %s175, 256, %s177, %s165, 384, 128, 8
        $region24: #{tpu_custom_call.1} parent=19 // pred_fallthru
          _
        // Predicated region
        $region25: #{tpu_custom_call.1} parent=19 // pred_check
          %p183 = pneg %p101
        $region26: #{tpu_custom_call.1} parent=19 // pred_check_branch
          %185 = sbr.rel (%p183) target = $region28
        $region27: #{tpu_custom_call.1} parent=19 // pred_region
          %s186 = smul.u32 %s21, 3
          %s187 = sadd.s32 %s186, %s22
          %p188 = scmp.lt.s32.totalorder %s187, 2
          %s189 = scalar_select %p188, %s187, 2
          %s190 = scalar_lea.vmem %s2, %s189
          %s191 = smul.u32 %s21, 3
          %s192 = sadd.s32 %s191, %s22
        $region28: #{tpu_custom_call.1} parent=19 // pred_fallthru
          _
      $region20: #{tpu_custom_call.1} parent=5 // pred_fallthru
        _
      %p193 = scmp.le.s32.totalorder 1, %s14
      %p194 = scmp.lt.s32.totalorder %s14, 4
      %p195 = pnand %p193, %p194
      %p196 = pneg %p195
      // Predicated region
      $region29: #{tpu_custom_call.1} parent=5 // pred_check
        _
      $region30: #{tpu_custom_call.1} parent=5 // pred_check_branch
        %198 = sbr.rel (%p195) target = $region32
      $region31: #{tpu_custom_call.1} parent=5 // pred_region
        %s199 = ssub.s32 %s14, 1
        // Predicated region
        $region33: #{tpu_custom_call.1} parent=31 // pred_check
          %p200 = pneg %p47
        $region34: #{tpu_custom_call.1} parent=31 // pred_check_branch
          %202 = sbr.rel (%p200) target = $region36
        $region35: #{tpu_custom_call.1} parent=31 // pred_region
          %203 = dma.done [#allocation5], 16
        $region36: #{tpu_custom_call.1} parent=31 // pred_fallthru
          _
        %s204 = sand.u32 %s64, 1
        %s205 = scalar_lea.sflag [#allocation4], %s204
        %s206 = sand.u32 %s64, 1
        %s207 = smul.addr %s206, 16
        %s208 = scalar_lea.vmem [#allocation7], %s207
        // Predicated region
        $region37: #{tpu_custom_call.1} parent=31 // pred_check
          %p209 = pneg %p77
        $region38: #{tpu_custom_call.1} parent=31 // pred_check_branch
          %211 = sbr.rel (%p209) target = $region40
        $region39: #{tpu_custom_call.1} parent=31 // pred_region
          %212 = dma.done %s205, 256
        $region40: #{tpu_custom_call.1} parent=31 // pred_fallthru
          _
        %213 = sfence
        %p214 = pneg %p47
        %p215 = pneg %p44
        %s216 = sand.u32 %s64, 1
        %s217 = scalar_lea.sflag [#allocation4], %s216
        %s218 = sand.u32 %s64, 1
        %s219 = smul.addr %s218, 16
        %s220 = scalar_lea.vmem [#allocation7], %s219
        %p221 = pneg %p77
        %p222 = pneg %p74
        %s223 = smul.u32 %s23, 3
        %s224 = sadd.s32 %s223, %s24
        %p225 = scmp.lt.s32.totalorder %s224, 2
        %s226 = scalar_select %p225, %s224, 2
        %s227 = scalar_lea.vmem %s2, %s226
        %p228 = pneg %p107
        %p229 = pneg %p104
        %p230 = pneg %p133
        %p231 = pneg %p130
        %s232 = smul.u32 %s23, 3
        %s233 = sadd.s32 %s232, %s24
        %s234 = smul.u32 %s23, 3
        %s235 = sadd.s32 %s234, %s24
        %p236 = scmp.lt.s32.totalorder %s235, 2
        %s237 = scalar_select %p236, %s235, 2
        %s238 = scalar_lea.vmem %s2, %s237
        %s239 = smul.u32 %s23, 3
        %s240 = sadd.s32 %s239, %s24
        %p241 = scmp.eq.s32.totalorder %s24, 0
        // Predicated region
        $region41: #{tpu_custom_call.1} parent=31 // pred_check
          %p242 = pneg %p241
        $region42: #{tpu_custom_call.1} parent=31 // pred_check_branch
          %244 = sbr.rel (%p242) target = $region44
        $region43: #{tpu_custom_call.1} parent=31 // pred_region
          %245 = vst [vmem:[#allocation2] sm:$0x1] 0.0
        $region44: #{tpu_custom_call.1} parent=31 // pred_fallthru
          _
        %v246 = vld [vmem:[%s208] sm:$0xff]
        %v247 = vld [vmem:[%s208 + $0x8] sm:$0x3]
        %s248 = sld [smem:[#allocation3]]
        %s249 = sld [smem:[#allocation3 + $0x1]]
        %s250 = sld [smem:[#allocation3 + $0x2]]
        %s251 = sld [smem:[#allocation3 + $0x3]]
        %s252 = smul.f32 %s251, 0.5
        %s253 = sld [smem:[#allocation3 + $0x4]]
        %s254 = smul.f32 %s253, 0.16666667
        %s255 = sld [smem:[#allocation3 + $0x5]]
        %s256 = sld [smem:[#allocation3 + $0x6]]
        %s257 = smul.f32 %s256, 0.5
        %s258 = sld [smem:[#allocation3 + $0x7]]
        %s259 = smul.f32 %s258, 0.5
        %vm260 = vcmask 1041408
        %v261 = vsel %vm260, %v247, -inf
        %v262 = vmax.f32 %v246, %v261
        %v263 = vrot.slane %v262, 4
        %v264 = vmax.f32 %v262, %v263
        %v265 = vrot.slane %v264, 2
        %v266 = vmax.f32 %v264, %v265
        %v267 = vrot.slane %v266, 1
        %v268 = vmax.f32 %v266, %v267
        %v269 = vsub.f32 %v246, %v268
        %v270 = vsub.f32 %v247, %v268
        %v271 = vmul.f32 %v269, 1.442695
        %v272 = vpow.pop %v271
        %v273 = vmul.f32 %v270, 1.442695
        %v274 = vpow.pop %v273
        %v275 = vsel %vm260, %v274, 0.0
        %v276 = vadd.f32 %v272, %v275
        %v277 = vrot.slane %v276, 4
        %v278 = vadd.f32 %v276, %v277
        %v279 = vrot.slane %v278, 2
        %v280 = vadd.f32 %v278, %v279
        %v281 = vrot.slane %v280, 1
        %v282 = vadd.f32 %v280, %v281
        %v283 = vrcp.pop %v282
        %v284 = vmul.f32 %v272, %v283
        %v285 = vmul.f32 %v274, %v283
        %v286 = vlaneseq
        %v287 = vshrl.u32 %v286, 7
        %v288 = vadd.s32 %v287, 8
        %v289 = vld [vmem:[%s238] sm:$0x1]
        %v290 = vlaneseq
        %v291 = vshrl.u32 %v290, 7
        %v292 = vsub.s32 0, %v291
        %v293 = vrot.slane %v289, %v292
        %vm294 = vcmp.eq.s32.totalorder %v287, %v293
        %vm295 = vcmp.eq.s32.totalorder %v288, %v293
        %s296 = ssub.f32 1.0, %s249
        %s297 = ssub.f32 0.0, %s249
        %v298 = vstv %s296
        %v299 = vstv %s297
        %v300 = vsel %vm294, %v298, %v299
        %v301 = vsel %vm295, %v298, %v299
        %v302 = vstv %s248
        %v303 = vsub.f32 %v284, %v302
        %v304 = vsub.f32 %v285, %v302
        %v305 = vmul.f32 %v303, %v300
        %v306 = vmul.f32 %v304, %v301
        %v307 = vstv %s254
        %v308 = vmul.f32 %v300, %v307
        %v309 = vmul.f32 %v301, %v307
        %v310 = vstv %s252
        %v311 = vadd.f32 %v310, %v308
        %v312 = vadd.f32 %v310, %v309
        %v313 = vmul.f32 %v300, %v311
        %v314 = vmul.f32 %v301, %v312
        %v315 = vstv %s250
        %v316 = vadd.f32 %v315, %v313
        %v317 = vadd.f32 %v315, %v314
        %v318 = vmul.f32 %v300, %v316
        %v319 = vmul.f32 %v301, %v317
        %v320 = vstv %s257
        %v321 = vmul.f32 %v300, %v320
        %v322 = vmul.f32 %v301, %v320
        %v323 = vstv %s255
        %v324 = vadd.f32 %v323, %v321
        %v325 = vadd.f32 %v323, %v322
        %v326 = vstv %s259
        %v327 = vmul.f32 %v303, %v326
        %v328 = vmul.f32 %v304, %v326
        %v329 = vadd.f32 %v324, %v327
        %v330 = vadd.f32 %v325, %v328
        %v331 = vmul.f32 %v305, %v329
        %v332 = vmul.f32 %v306, %v330
        %v333 = vadd.f32 %v318, %v331
        %v334 = vadd.f32 %v319, %v332
        %s335 = smul.u32 %s23, 3
        %s336 = sadd.s32 %s335, %s24
        %p337 = scmp.eq.s32.totalorder %s336, 2
        %p338 = scmp.ne.s32.totalorder %s336, 2
        // Predicated region
        $region45: #{tpu_custom_call.1} parent=31 // pred_check
          %p339 = pneg %p338
        $region46: #{tpu_custom_call.1} parent=31 // pred_check_branch
          %341 = sbr.rel (%p339) target = $region48
        $region47: #{tpu_custom_call.1} parent=31 // pred_region
          %v342 = vld [vmem:[#allocation2] sm:$0x1]
          %v343 = vsel %vm260, %v334, 0.0
          %v344 = vadd.f32 %v333, %v343
          %v345 = vrot.slane %v344, 4
          %v346 = vadd.f32 %v344, %v345
          %v347 = vrot.slane %v346, 2
          %v348 = vadd.f32 %v346, %v347
          %v349 = vrot.slane %v348, 1
          %v350 = vadd.f32 %v348, %v349
          %v351 = vadd.f32 %v342, %v350
          %352 = vst [vmem:[#allocation2] sm:$0x1] %v351
        $region48: #{tpu_custom_call.1} parent=31 // pred_fallthru
          _
        // Predicated region
        $region49: #{tpu_custom_call.1} parent=31 // pred_check
          %p353 = pneg %p337
        $region50: #{tpu_custom_call.1} parent=31 // pred_check_branch
          %355 = sbr.rel (%p353) target = $region52
        $region51: #{tpu_custom_call.1} parent=31 // pred_region
          %v356 = vlaneseq
          %v357 = vand.u32 %v356, 127
          %s358 = smul.u32 %s336, 128
          %v359 = vstv %s358
          %v360 = vadd.s32 %v359, %v357
          %vm361 = vcmp.lt.s32.totalorder %v360, 300
          %v362 = vsel %vm361, %v333, 0.0
          %v363 = vsel %vm361, %v334, 0.0
          %v364 = vld [vmem:[#allocation2] sm:$0x1]
          %v365 = vsel %vm260, %v363, 0.0
          %v366 = vadd.f32 %v362, %v365
          %v367 = vrot.slane %v366, 4
          %v368 = vadd.f32 %v366, %v367
          %v369 = vrot.slane %v368, 2
          %v370 = vadd.f32 %v368, %v369
          %v371 = vrot.slane %v370, 1
          %v372 = vadd.f32 %v370, %v371
          %v373 = vadd.f32 %v364, %v372
          %374 = vst [vmem:[#allocation2] sm:$0x1] %v373
        $region52: #{tpu_custom_call.1} parent=31 // pred_fallthru
          _
        %p375 = scmp.eq.s32.totalorder %s24, 2
        // Predicated region
        $region53: #{tpu_custom_call.1} parent=31 // pred_check
          %p376 = pneg %p375
        $region54: #{tpu_custom_call.1} parent=31 // pred_check_branch
          %378 = sbr.rel (%p376) target = $region56
        $region55: #{tpu_custom_call.1} parent=31 // pred_region
          %v379 = vld [vmem:[#allocation2] sm:$0x1]
          %vm380 = vcmask 1040384
          %v381 = vsel %vm380, %v379, 0.0
          %382 = vadd.xlane.f32.xlu0 %v381
          %v383 = vpop.xlane.xlu0 %382
          %v384 = vrot.slane %v383, 4
          %v385 = vadd.f32 %v383, %v384
          %v386 = vrot.slane %v385, 2
          %v387 = vadd.f32 %v385, %v386
          %v388 = vrot.slane %v387, 1
          %v389 = vadd.f32 %v387, %v388
          %s390 = vtos %v389
          %s391 = smul.f32 %s390, -0.1
          %s392 = scalar_lea.smem [#allocation8], 0
          %393 = sst [smem:[%s392]] %s391
        $region56: #{tpu_custom_call.1} parent=31 // pred_fallthru
          _
        // Predicated region
        $region57: #{tpu_custom_call.1} parent=31 // pred_check
          %p394 = pneg %p130
        $region58: #{tpu_custom_call.1} parent=31 // pred_check_branch
          %396 = sbr.rel (%p394) target = $region60
        $region59: #{tpu_custom_call.1} parent=31 // pred_region
          %s398 = ssub.s32 16, 16
          %399 = vsyncadd [#allocation6], %s398
          %s400 = smul.addr %s23, 16
          %s401 = scalar_lea.hbm %s3, %s400
          %404 = dma.smem_to_hbm [#allocation8], 16, %s401, [#allocation6]
        $region60: #{tpu_custom_call.1} parent=31 // pred_fallthru
          _
        // Predicated region
        $region61: #{tpu_custom_call.1} parent=31 // pred_check
          %p405 = pneg %p130
        $region62: #{tpu_custom_call.1} parent=31 // pred_check_branch
          %407 = sbr.rel (%p405) target = $region64
        $region63: #{tpu_custom_call.1} parent=31 // pred_region
          %408 = dma.done [#allocation6], 16
        $region64: #{tpu_custom_call.1} parent=31 // pred_fallthru
          _
        %409 = sfence
      $region32: #{tpu_custom_call.1} parent=5 // pred_fallthru
        _
      %p410 = scmp.le.s32.totalorder 2, %s14
      // Predicated region
      $region65: #{tpu_custom_call.1} parent=5 // pred_check
        %p411 = pneg %p410
      $region66: #{tpu_custom_call.1} parent=5 // pred_check_branch
        %413 = sbr.rel (%p411) target = $region68
      $region67: #{tpu_custom_call.1} parent=5 // pred_region
        %s414 = ssub.s32 %s14, 2
      $region68: #{tpu_custom_call.1} parent=5 // pred_fallthru
        _
    $region6: #{tpu_custom_call.1} parent=1 // loop_footer
      %s18 = sadd.s32 1, %s14
    $region7: #{tpu_custom_call.1} parent=1 // loop_footer_branch
      %13 = sbr.rel target = $region3
    $region8: #{tpu_custom_call.1} parent=1 // loop_exit
      _
    %415 = vsyncpa [#allocation4], 1
    %s416 = scalar_lea.sflag [#allocation4], 1
    %417 = vsyncpa %s416, 1
    %418 = vsyncpa [#allocation5], 1
    %s419 = scalar_lea.sflag [#allocation5], 1
    %420 = vsyncpa %s419, 1
    %421 = vsyncpa [#allocation6], 1
    %s422 = scalar_lea.sflag [#allocation6], 1
    %423 = vsyncpa %s422, 1

</llo_original>
